<compile_context>
chip_gen: v5e
topology: v5e:2x2
jax: 0.10.0
libtpu: 0.0.40
codegen_flags: <defaults>
</compile_context>

<pallas_src>
import jax
import jax.numpy as jnp
from jax import lax
from jax.experimental import pallas as pl
from jax.experimental.pallas import tpu as pltpu


def _node_kernel(pc_ref, wblk_ref, u_ref, bias_ref, y_ref, uv_ref, a_ref,
                 invc_ref, o_ref):
    # --- x branch: ReLU -> conv (block-diag weight folds BN scale and the
    #     W-direction nearest upsample) -> H-direction nearest upsample -> +bias
    pc = jnp.maximum(pc_ref[...], 0)                                      # ReLU (bf16)
    conv = jnp.dot(pc, wblk_ref[...],
                   preferred_element_type=jnp.float32)                    # (OH, W*C) f32
    upx = jnp.dot(u_ref[...], conv,
                  preferred_element_type=jnp.float32)                     # (H, W*C) f32

    # --- y branch: 3x3 avg pool (stride 1, pad 1) as banded matmuls on the
    #     (otherwise idle) MXU, then per-pixel 1/valid-count on the VPU.
    yb = y_ref[...]                                                       # (H, W*C) f32
    vert = jnp.dot(uv_ref[...], yb, preferred_element_type=jnp.float32)   # (H, W*C)
    pool = jnp.dot(vert, a_ref[...],
                   preferred_element_type=jnp.float32) * invc_ref[...]    # (H, W*C)

    # --- sum(consistent_dim([x', y'])): both branches are at (H, W) here.
    o_ref[...] = (upx + bias_ref[...] + pool).astype(o_ref.dtype)


def node_forward(x_nchw, y_nchw, conv_w, bn_gamma, bn_beta, bn_mean, bn_var,
                 eps=1e-5, conv_stride=2, count_include_pad=False):
    N, C, H, W = x_nchw.shape
    assert y_nchw.shape == (N, C, H, W)
    WC = W * C

    x = jnp.transpose(x_nchw, (0, 2, 3, 1)).astype(jnp.float32)   # NHWC
    y = jnp.transpose(y_nchw, (0, 2, 3, 1)).astype(jnp.float32)   # NHWC

    # Conv3x3 pad=1 output resolution; both branches are nearest-interpolated
    # to the max resolution, which is the pool branch's (H, W).
    OH = (H + 2 - 3) // conv_stride + 1
    OW = (W + 2 - 3) // conv_stride + 1
    K2 = OW * 9 * C

    # im2col patches at the NATIVE OHxOW resolution (bf16).
    # Lane layout per conv-output row: ow*9C + (kh*3+kw)*C + cin.
    xpad = jnp.pad(x, ((0, 0), (1, 1), (1, 1), (0, 0)))
    p_list = []
    for kh in range(3):
        for kw in range(3):
            p_list.append(
                xpad[:, kh:kh + conv_stride * (OH - 1) + 1:conv_stride,
                        kw:kw + conv_stride * (OW - 1) + 1:conv_stride, :])
    patches = jnp.stack(p_list, axis=3)                        # (N, OH, OW, 9, C)
    Pc = patches.reshape(N, OH, K2).astype(jnp.bfloat16)

    # PyTorch nearest-interp source indices (src = floor(dst * in / out)).
    rs = (jnp.arange(H) * OH) // H                              # (H,)
    cs = (jnp.arange(W) * OW) // W                              # (W,)

    # Conv weight OIHW -> ((kh,kw,cin), cout), BN scale folded in; then a
    # block-diagonal weight that also performs the W-direction upsample:
    #   Wblk[ow*9C + k, w*C + c] = Wm_s[k, c] * (cs[w] == ow)
    scale = (bn_gamma / jnp.sqrt(bn_var + eps)).astype(jnp.float32)
    bias = (bn_beta - bn_mean * scale).astype(jnp.float32)
    Wm = jnp.transpose(conv_w.astype(jnp.float32), (2, 3, 1, 0)).reshape(9 * C, C)
    Wm_s = Wm * scale[None, :]
    sel = (cs[None, :] == jnp.arange(OW)[:, None]).astype(jnp.float32)   # (OW, W)
    Wblk = jnp.einsum('kc,ow->okwc', Wm_s, sel).reshape(K2, WC).astype(jnp.bfloat16)

    # H-direction nearest upsample as a one-hot (H, OH) matrix.
    U = (rs[:, None] == jnp.arange(OH)[None, :]).astype(jnp.float32)     # (H, OH)

    # BN bias, tiled across W so it is lane-dense in the (H, W*C) layout.
    bias_wc = jnp.tile(bias, (W,)).reshape(1, WC)

    # 3x3 avg-pool operands: banded vertical/horizontal sum matrices and the
    # per-pixel 1/valid-count map.
    hh = jnp.arange(H)
    ww = jnp.arange(W)
    Uv = (jnp.abs(hh[:, None] - hh[None, :]) <= 1).astype(jnp.float32)   # (H, H)
    Aw = (jnp.abs(ww[:, None] - ww[None, :]) <= 1).astype(jnp.float32)   # (W, W)
    A = (Aw[:, None, :, None] *
         jnp.eye(C, dtype=jnp.float32)[None, :, None, :]).reshape(WC, WC)
    if count_include_pad:
        # TODO(synk): PyTorch nn.AvgPool2d default; NAO/DARTS-style search
        # spaces use count_include_pad=False (this function's default).
        invc = jnp.full((H, W), 1.0 / 9.0, dtype=jnp.float32)
    else:
        rv = 3.0 - (hh == 0).astype(jnp.float32) - (hh == H - 1).astype(jnp.float32)
        cv = 3.0 - (ww == 0).astype(jnp.float32) - (ww == W - 1).astype(jnp.float32)
        invc = 1.0 / (rv[:, None] * cv[None, :])
    invc_wc = jnp.repeat(invc.astype(jnp.float32), C, axis=1)            # (H, W*C)

    y_wc = y.reshape(N, H, WC)                                           # lane-dense y

    out = pl.pallas_call(
        _node_kernel,
        out_shape=jax.ShapeDtypeStruct((N, H, WC), jnp.float32),
        grid=(N,),
        in_specs=[
            pl.BlockSpec((None, OH, K2), lambda i: (i, 0, 0)),   # conv patches (bf16)
            pl.BlockSpec((K2, WC), lambda i: (0, 0)),            # block-diag weight (bf16)
            pl.BlockSpec((H, OH), lambda i: (0, 0)),             # H-upsample one-hot
            pl.BlockSpec((1, WC), lambda i: (0, 0)),             # BN bias (lane-tiled)
            pl.BlockSpec((None, H, WC), lambda i: (i, 0, 0)),    # raw y image
            pl.BlockSpec((H, H), lambda i: (0, 0)),              # vertical pool band
            pl.BlockSpec((WC, WC), lambda i: (0, 0)),            # horizontal pool band
            pl.BlockSpec((H, WC), lambda i: (0, 0)),             # 1/valid-count
        ],
        out_specs=pl.BlockSpec((None, H, WC), lambda i: (i, 0, 0)),
        compiler_params=pltpu.CompilerParams(dimension_semantics=("parallel",)),
    )(Pc, Wblk, U, bias_wc, y_wc, Uv, A, invc_wc)

    # (N, H, W*C) -> NCHW
    return out.reshape(N, H, W, C).transpose(0, 3, 1, 2)


def _node_reference(x_nchw, y_nchw, conv_w, bn_gamma, bn_beta, bn_mean, bn_var,
                    eps=1e-5, conv_stride=2, count_include_pad=False):
    """Pure-JAX reference of the same synthetic Node forward."""
    N, C, H, W = x_nchw.shape
    x = jnp.transpose(x_nchw, (0, 2, 3, 1)).astype(jnp.float32)
    y = jnp.transpose(y_nchw, (0, 2, 3, 1)).astype(jnp.float32)
    w_hwio = jnp.transpose(conv_w.astype(jnp.float32), (2, 3, 1, 0))
    conv = lax.conv_general_dilated(
        jnp.maximum(x, 0.0), w_hwio, window_strides=(conv_stride, conv_stride),
        padding=((1, 1), (1, 1)), dimension_numbers=("NHWC", "HWIO", "NHWC"))
    scale = bn_gamma / jnp.sqrt(bn_var + eps)
    bias = bn_beta - bn_mean * scale
    bn = conv * scale[None, None, None, :] + bias[None, None, None, :]
    OH, OW = bn.shape[1], bn.shape[2]
    rs = (jnp.arange(H) * OH) // H
    cs = (jnp.arange(W) * OW) // W
    upx = bn[:, rs][:, :, cs, :]
    ypad = jnp.pad(y, ((0, 0), (1, 1), (1, 1), (0, 0)))
    psum = sum(ypad[:, kh:kh + H, kw:kw + W, :]
               for kh in range(3) for kw in range(3))
    if count_include_pad:
        cnt = jnp.full((H, W), 9.0, dtype=jnp.float32)
    else:
        hh, ww = jnp.arange(H), jnp.arange(W)
        rv = 3.0 - (hh == 0).astype(jnp.float32) - (hh == H - 1).astype(jnp.float32)
        cv = 3.0 - (ww == 0).astype(jnp.float32) - (ww == W - 1).astype(jnp.float32)
        cnt = rv[:, None] * cv[None, :]
    pool = psum / cnt[None, :, :, None]
    return jnp.transpose(upx + pool, (0, 3, 1, 2))


if __name__ == "__main__":
    N, C, H, W = 2, 8, 16, 16          # W * C = 128 -> lane-dense kernel layout
    key = jax.random.PRNGKey(0)
    kx, ky, kw_, kg, kb = jax.random.split(key, 5)

    x = jax.random.normal(kx, (N, C, H, W), dtype=jnp.float32)
    y = jax.random.normal(ky, (N, C, H, W), dtype=jnp.float32)

    # Deterministic synthetic parameters (channels->channels conv, affine BN).
    conv_w = 0.1 * jax.random.normal(kw_, (C, C, 3, 3), dtype=jnp.float32)   # OIHW
    bn_gamma = 1.0 + 0.05 * jax.random.normal(kg, (C,), dtype=jnp.float32)
    bn_beta = 0.05 * jax.random.normal(kb, (C,), dtype=jnp.float32)
    bn_mean = jnp.zeros((C,), dtype=jnp.float32)
    bn_var = jnp.ones((C,), dtype=jnp.float32)

    out = node_forward(x, y, conv_w, bn_gamma, bn_beta, bn_mean, bn_var)
    out = jax.block_until_ready(out)
    assert out.shape == (N, C, H, W)
    assert bool(jnp.all(jnp.isfinite(out)))

    # Loose tolerance: conv operands are bf16 in the kernel, f32 in the ref.
    ref = _node_reference(x, y, conv_w, bn_gamma, bn_beta, bn_mean, bn_var)
    max_err = float(jnp.max(jnp.abs(out - ref)))
    assert max_err < 0.1, f"kernel/reference mismatch: max abs err {max_err}"
    print("KERNEL_OK")
</pallas_src>

<mosaic_0001>
module attributes {stable_mosaic.version = 11 : i64} {
  func.func @_node_kernel(%arg0: i32, %arg1: memref<1x8x576xbf16, #tpu.memory_space<vmem>>, %arg2: memref<576x128xbf16, #tpu.memory_space<vmem>>, %arg3: memref<16x8xf32, #tpu.memory_space<vmem>>, %arg4: memref<1x128xf32, #tpu.memory_space<vmem>>, %arg5: memref<1x16x128xf32, #tpu.memory_space<vmem>>, %arg6: memref<16x16xf32, #tpu.memory_space<vmem>>, %arg7: memref<128x128xf32, #tpu.memory_space<vmem>>, %arg8: memref<16x128xf32, #tpu.memory_space<vmem>>, %arg9: memref<1x16x128xf32, #tpu.memory_space<vmem>>) attributes {dimension_semantics = [#tpu.dimension_semantics<parallel>], iteration_bounds = array<i64: 2>, scalar_prefetch = 0 : i64, scratch_operands = 0 : i64, tpu.core_type = #tpu.core_type<tc>, window_params = [{transform_indices = @transform_0, window_bounds = array<i64: 1, 8, 576>}, {pipeline_mode = #tpu.pipeline_mode<synchronous>, transform_indices = @transform_1, window_bounds = array<i64: 576, 128>}, {pipeline_mode = #tpu.pipeline_mode<synchronous>, transform_indices = @transform_2, window_bounds = array<i64: 16, 8>}, {pipeline_mode = #tpu.pipeline_mode<synchronous>, transform_indices = @transform_3, window_bounds = array<i64: 1, 128>}, {transform_indices = @transform_4, window_bounds = array<i64: 1, 16, 128>}, {pipeline_mode = #tpu.pipeline_mode<synchronous>, transform_indices = @transform_5, window_bounds = array<i64: 16, 16>}, {pipeline_mode = #tpu.pipeline_mode<synchronous>, transform_indices = @transform_6, window_bounds = array<i64: 128, 128>}, {pipeline_mode = #tpu.pipeline_mode<synchronous>, transform_indices = @transform_7, window_bounds = array<i64: 16, 128>}, {transform_indices = @transform_8, window_bounds = array<i64: 1, 16, 128>}]} {
    %c0 = arith.constant 0 : index
    %c0_0 = arith.constant 0 : index
    %c0_1 = arith.constant 0 : index
    %0 = vector.load %arg1[%c0, %c0_0, %c0_1] : memref<1x8x576xbf16, #tpu.memory_space<vmem>>, vector<1x8x576xbf16>
    %1 = vector.shape_cast %0 : vector<1x8x576xbf16> to vector<8x576xbf16>
    %cst = arith.constant 0.000000e+00 : bf16
    %2 = vector.broadcast %cst : bf16 to vector<8x576xbf16>
    %3 = arith.maximumf %1, %2 : vector<8x576xbf16>
    %c0_2 = arith.constant 0 : index
    %c0_3 = arith.constant 0 : index
    %4 = vector.load %arg2[%c0_2, %c0_3] : memref<576x128xbf16, #tpu.memory_space<vmem>>, vector<576x128xbf16>
    %cst_4 = arith.constant dense<0.000000e+00> : vector<8x128xf32>
    %5 = tpu.matmul %3, %4, %cst_4 {dimension_numbers = #tpu.dot_dimension_numbers<[1], [0], [0], [1], [0, 0, 1, 1], [], []>} : vector<8x576xbf16>, vector<576x128xbf16>, vector<8x128xf32> -> vector<8x128xf32>
    %c0_5 = arith.constant 0 : index
    %c0_6 = arith.constant 0 : index
    %6 = vector.load %arg3[%c0_5, %c0_6] : memref<16x8xf32, #tpu.memory_space<vmem>>, vector<16x8xf32>
    %cst_7 = arith.constant dense<0.000000e+00> : vector<16x128xf32>
    %7 = tpu.matmul %6, %5, %cst_7 {dimension_numbers = #tpu.dot_dimension_numbers<[1], [0], [0], [1], [0, 0, 1, 1], [], []>} : vector<16x8xf32>, vector<8x128xf32>, vector<16x128xf32> -> vector<16x128xf32>
    %c0_8 = arith.constant 0 : index
    %c0_9 = arith.constant 0 : index
    %c0_10 = arith.constant 0 : index
    %8 = vector.load %arg5[%c0_8, %c0_9, %c0_10] : memref<1x16x128xf32, #tpu.memory_space<vmem>>, vector<1x16x128xf32>
    %9 = vector.shape_cast %8 : vector<1x16x128xf32> to vector<16x128xf32>
    %c0_11 = arith.constant 0 : index
    %c0_12 = arith.constant 0 : index
    %10 = vector.load %arg6[%c0_11, %c0_12] : memref<16x16xf32, #tpu.memory_space<vmem>>, vector<16x16xf32>
    %cst_13 = arith.constant dense<0.000000e+00> : vector<16x128xf32>
    %11 = tpu.matmul %10, %9, %cst_13 {dimension_numbers = #tpu.dot_dimension_numbers<[1], [0], [0], [1], [0, 0, 1, 1], [], []>} : vector<16x16xf32>, vector<16x128xf32>, vector<16x128xf32> -> vector<16x128xf32>
    %c0_14 = arith.constant 0 : index
    %c0_15 = arith.constant 0 : index
    %12 = vector.load %arg7[%c0_14, %c0_15] : memref<128x128xf32, #tpu.memory_space<vmem>>, vector<128x128xf32>
    %cst_16 = arith.constant dense<0.000000e+00> : vector<16x128xf32>
    %13 = tpu.matmul %11, %12, %cst_16 {dimension_numbers = #tpu.dot_dimension_numbers<[1], [0], [0], [1], [0, 0, 1, 1], [], []>} : vector<16x128xf32>, vector<128x128xf32>, vector<16x128xf32> -> vector<16x128xf32>
    %c0_17 = arith.constant 0 : index
    %c0_18 = arith.constant 0 : index
    %14 = vector.load %arg8[%c0_17, %c0_18] : memref<16x128xf32, #tpu.memory_space<vmem>>, vector<16x128xf32>
    %15 = arith.mulf %13, %14 : vector<16x128xf32>
    %c0_19 = arith.constant 0 : index
    %c0_20 = arith.constant 0 : index
    %16 = vector.load %arg4[%c0_19, %c0_20] : memref<1x128xf32, #tpu.memory_space<vmem>>, vector<1x128xf32>
    %17 = vector.broadcast %16 : vector<1x128xf32> to vector<16x128xf32>
    %18 = arith.addf %7, %17 : vector<16x128xf32>
    %19 = arith.addf %18, %15 : vector<16x128xf32>
    %c0_21 = arith.constant 0 : index
    %c0_22 = arith.constant 0 : index
    %c0_23 = arith.constant 0 : index
    %20 = vector.load %arg9[%c0_21, %c0_22, %c0_23] : memref<1x16x128xf32, #tpu.memory_space<vmem>>, vector<1x16x128xf32>
    %21 = vector.shape_cast %20 : vector<1x16x128xf32> to vector<16x128xf32>
    %22 = vector.shape_cast %19 : vector<16x128xf32> to vector<1x16x128xf32>
    tpu.vector_store %arg9[%c0_21, %c0_22, %c0_23], %22 {strides = array<i32>} : memref<1x16x128xf32, #tpu.memory_space<vmem>>, vector<1x16x128xf32>,
    return
  }
  func.func @transform_0(%arg0: i32) -> (i32, i32, i32) {
    %c0_i32 = arith.constant 0 : i32
    %c0_i32_0 = arith.constant 0 : i32
    %c0_i32_1 = arith.constant 0 : i32
    return %arg0, %c0_i32, %c0_i32_0 : i32, i32, i32
  }
  func.func @transform_1(%arg0: i32) -> (i32, i32) {
    %c0_i32 = arith.constant 0 : i32
    %c0_i32_0 = arith.constant 0 : i32
    %c0_i32_1 = arith.constant 0 : i32
    return %c0_i32, %c0_i32_0 : i32, i32
  }
  func.func @transform_2(%arg0: i32) -> (i32, i32) {
    %c0_i32 = arith.constant 0 : i32
    %c0_i32_0 = arith.constant 0 : i32
    %c0_i32_1 = arith.constant 0 : i32
    return %c0_i32, %c0_i32_0 : i32, i32
  }
  func.func @transform_3(%arg0: i32) -> (i32, i32) {
    %c0_i32 = arith.constant 0 : i32
    %c0_i32_0 = arith.constant 0 : i32
    %c0_i32_1 = arith.constant 0 : i32
    return %c0_i32, %c0_i32_0 : i32, i32
  }
  func.func @transform_4(%arg0: i32) -> (i32, i32, i32) {
    %c0_i32 = arith.constant 0 : i32
    %c0_i32_0 = arith.constant 0 : i32
    %c0_i32_1 = arith.constant 0 : i32
    return %arg0, %c0_i32, %c0_i32_0 : i32, i32, i32
  }
  func.func @transform_5(%arg0: i32) -> (i32, i32) {
    %c0_i32 = arith.constant 0 : i32
    %c0_i32_0 = arith.constant 0 : i32
    %c0_i32_1 = arith.constant 0 : i32
    return %c0_i32, %c0_i32_0 : i32, i32
  }
  func.func @transform_6(%arg0: i32) -> (i32, i32) {
    %c0_i32 = arith.constant 0 : i32
    %c0_i32_0 = arith.constant 0 : i32
    %c0_i32_1 = arith.constant 0 : i32
    return %c0_i32, %c0_i32_0 : i32, i32
  }
  func.func @transform_7(%arg0: i32) -> (i32, i32) {
    %c0_i32 = arith.constant 0 : i32
    %c0_i32_0 = arith.constant 0 : i32
    %c0_i32_1 = arith.constant 0 : i32
    return %c0_i32, %c0_i32_0 : i32, i32
  }
  func.func @transform_8(%arg0: i32) -> (i32, i32, i32) {
    %c0_i32 = arith.constant 0 : i32
    %c0_i32_0 = arith.constant 0 : i32
    %c0_i32_1 = arith.constant 0 : i32
    return %arg0, %c0_i32, %c0_i32_0 : i32, i32, i32
  }
}

</mosaic_0001>

<llo_original>
// kernel: tpu_custom_call.1
$region0: #{tpu_custom_call.1}
  #allocation0 [shape = 'u32[]', space=smem, size = 0x4, offset = 0x4, fixed_abs, tag = 'smem constant byte address 0x4 - core index']
  #allocation1 [shape = 'u32[72,128]{1,0:T(1,128)}', space=vmem, size = 0x9000, scoped, tag = 'internal scratch']
  %s0 = inlined_call_operand.hbm [shape: bf16[2,8,576], index: 0, kind: input, shape index: {}]
  %s1 = inlined_call_operand.hbm [shape: bf16[576,128], index: 1, kind: input, shape index: {}]
  %s2 = inlined_call_operand.vmem [shape: f32[16,8], index: 2, kind: input, shape index: {}]
  %s3 = inlined_call_operand.vmem [shape: f32[1,128], index: 3, kind: input, shape index: {}]
  %s4 = inlined_call_operand.hbm [shape: f32[2,16,128], index: 4, kind: input, shape index: {}]
  %s5 = inlined_call_operand.vmem [shape: f32[16,16], index: 5, kind: input, shape index: {}]
  %s6 = inlined_call_operand.hbm [shape: f32[128,128], index: 6, kind: input, shape index: {}]
  %s7 = inlined_call_operand.hbm [shape: f32[16,128], index: 7, kind: input, shape index: {}]
  %s8 = inlined_call_operand.hbm [shape: f32[2,16,128], index: 8, kind: output, shape index: {}]
  %s9 = sld [smem:[#allocation0]]
  $region85: #{tpu_custom_call.1} parent=0
    _
  %s11 = ssub.s32 1, %s9
  %s12 = scalar_select 0, %s11, %s9
  $region1: #{tpu_custom_call.1} parent=0
    #allocation2 [shape = 'u8[20480]{0}', space=vmem, size = 0x5000, scoped, tag = 'input window, operand 0']
    #allocation3 [shape = 's32[2]{0}', space=sflag, size = 0x8, scoped, tag = 'scoped memory for tpu_custom_call.1']
    #allocation4 [shape = 's32[2]{0}', space=sflag, size = 0x8, scoped, tag = 'scoped memory for tpu_custom_call.1']
    #allocation5 [shape = 'u8[147456]{0}', space=vmem, size = 0x24000, scoped, tag = 'input window, operand 1, single buffered']
    #allocation6 [shape = 's32[1]{0}', space=sflag, size = 0x4, scoped, tag = 'scoped memory for tpu_custom_call.1']
    #allocation7 [shape = 'u8[16384]{0}', space=vmem, size = 0x4000, scoped, tag = 'input window, operand 4']
    #allocation8 [shape = 'u8[65536]{0}', space=vmem, size = 0x10000, scoped, tag = 'input window, operand 6, single buffered']
    #allocation9 [shape = 'u8[8192]{0}', space=vmem, size = 0x2000, scoped, tag = 'input window, operand 7, single buffered']
    #allocation10 [shape = 's32[1]{0}', space=sflag, size = 0x4, scoped, tag = 'scoped memory for tpu_custom_call.1']
    #allocation11 [shape = 'u8[16384]{0}', space=vmem, size = 0x4000, scoped, tag = 'output window, operand 0']
    %13 = vsyncpa [#allocation3], 0
    %s14 = scalar_lea.sflag [#allocation3], 1
    %15 = vsyncpa %s14, 0
    %16 = vsyncpa [#allocation6], 0
    %17 = vsyncpa [#allocation10], 0
    %18 = vsyncpa [#allocation4], 0
    %s19 = scalar_lea.sflag [#allocation4], 1
    %20 = vsyncpa %s19, 0
    loop: start=0, step=1, limit=4
    $region2: #{tpu_custom_call.1} parent=1 // loop_pre_header
      _
    $region3: #{tpu_custom_call.1} parent=1 // loop_header
      %s22 = sphi 0, %s26
      %p23 = scmp.ge.s32.totalorder %s22, 4
      %s32 = sphi 0, %s34
      %s35 = sphi 0, %s32
      %s36 = sphi 0, %s35
      %s52 = sphi 0, %s36
      %s56 = sphi 0, %s56
      %s58 = sphi 0, %s56
      %s59 = sphi 0, %s58
      %s73 = sphi 0, %s59
      %s77 = sphi 0, %s77
      %s79 = sphi 0, %s77
      %s80 = sphi 0, %s79
      %s94 = sphi 0, %s80
      %s98 = sphi 0, %s98
      %s100 = sphi 0, %s98
      %s101 = sphi 0, %s100
      %s115 = sphi 0, %s101
      %s121 = sphi 0, %s123
      %s124 = sphi 0, %s121
      %s125 = sphi 0, %s124
      %s141 = sphi 0, %s125
      %s145 = sphi 0, %s145
      %s147 = sphi 0, %s145
      %s148 = sphi 0, %s147
      %s162 = sphi 0, %s148
      %s166 = sphi 0, %s166
      %s168 = sphi 0, %s166
      %s169 = sphi 0, %s168
      %s183 = sphi 0, %s169
      %s187 = sphi 0, %s187
      %s189 = sphi 0, %s187
      %s190 = sphi 0, %s189
      %s204 = sphi 0, %s190
      %s210 = sphi 0, %s212
      %s213 = sphi 0, %s210
      %s214 = sphi 0, %s213
      %s230 = sphi 0, %s214
    $region4: #{tpu_custom_call.1} parent=1 // loop_header_branch
      %25 = sbr.rel (%p23) target = $region8
    $region5: #{tpu_custom_call.1} parent=1 // loop_body
      %s27 = ssub.s32 %s22, 1
      %s28 = ssub.s32 %s22, 2
      %s29 = sadd.s32 %s22, 1
      %s30 = ssub.s32 %s22, %s29
      %p31 = scmp.eq.s32.totalorder %s30, 0
      %s33 = sadd.s32 %s32, 1
      %s34 = scalar_select %p31, %s32, %s33
      %p37 = pneg %p31
      %p38 = scmp.eq.s32.totalorder %s22, 1
      %p39 = por %p37, %p38
      %p40 = scmp.ne.s32.totalorder %s32, %s35
      %p41 = scmp.eq.s32.totalorder %s22, 0
      %p42 = por %p40, %p41
      %p43 = scmp.ne.s32.totalorder %s32, %s35
      %p44 = scmp.eq.s32.totalorder %s27, 1
      %p45 = por %p43, %p44
      %p46 = scmp.ne.s32.totalorder %s35, %s36
      %p47 = scmp.eq.s32.totalorder %s27, 0
      %p48 = por %p46, %p47
      %p49 = scmp.ne.s32.totalorder %s35, %s36
      %p50 = scmp.eq.s32.totalorder %s28, 1
      %p51 = por %p49, %p50
      %p53 = scmp.ne.s32.totalorder %s36, %s52
      %p54 = scmp.eq.s32.totalorder %s28, 0
      %p55 = por %p53, %p54
      %s57 = sadd.s32 %s56, 1
      %p60 = scmp.eq.s32.totalorder %s22, 1
      %p61 = scmp.ne.s32.totalorder %s56, %s58
      %p62 = scmp.eq.s32.totalorder %s22, 0
      %p63 = por %p61, %p62
      %p64 = scmp.ne.s32.totalorder %s56, %s58
      %p65 = scmp.eq.s32.totalorder %s27, 1
      %p66 = por %p64, %p65
      %p67 = scmp.ne.s32.totalorder %s58, %s59
      %p68 = scmp.eq.s32.totalorder %s27, 0
      %p69 = por %p67, %p68
      %p70 = scmp.ne.s32.totalorder %s58, %s59
      %p71 = scmp.eq.s32.totalorder %s28, 1
      %p72 = por %p70, %p71
      %p74 = scmp.ne.s32.totalorder %s59, %s73
      %p75 = scmp.eq.s32.totalorder %s28, 0
      %p76 = por %p74, %p75
      %s78 = sadd.s32 %s77, 1
      %p81 = scmp.eq.s32.totalorder %s22, 1
      %p82 = scmp.ne.s32.totalorder %s77, %s79
      %p83 = scmp.eq.s32.totalorder %s22, 0
      %p84 = por %p82, %p83
      %p85 = scmp.ne.s32.totalorder %s77, %s79
      %p86 = scmp.eq.s32.totalorder %s27, 1
      %p87 = por %p85, %p86
      %p88 = scmp.ne.s32.totalorder %s79, %s80
      %p89 = scmp.eq.s32.totalorder %s27, 0
      %p90 = por %p88, %p89
      %p91 = scmp.ne.s32.totalorder %s79, %s80
      %p92 = scmp.eq.s32.totalorder %s28, 1
      %p93 = por %p91, %p92
      %p95 = scmp.ne.s32.totalorder %s80, %s94
      %p96 = scmp.eq.s32.totalorder %s28, 0
      %p97 = por %p95, %p96
      %s99 = sadd.s32 %s98, 1
      %p102 = scmp.eq.s32.totalorder %s22, 1
      %p103 = scmp.ne.s32.totalorder %s98, %s100
      %p104 = scmp.eq.s32.totalorder %s22, 0
      %p105 = por %p103, %p104
      %p106 = scmp.ne.s32.totalorder %s98, %s100
      %p107 = scmp.eq.s32.totalorder %s27, 1
      %p108 = por %p106, %p107
      %p109 = scmp.ne.s32.totalorder %s100, %s101
      %p110 = scmp.eq.s32.totalorder %s27, 0
      %p111 = por %p109, %p110
      %p112 = scmp.ne.s32.totalorder %s100, %s101
      %p113 = scmp.eq.s32.totalorder %s28, 1
      %p114 = por %p112, %p113
      %p116 = scmp.ne.s32.totalorder %s101, %s115
      %p117 = scmp.eq.s32.totalorder %s28, 0
      %p118 = por %p116, %p117
      %s119 = ssub.s32 %s22, %s29
      %p120 = scmp.eq.s32.totalorder %s119, 0
      %s122 = sadd.s32 %s121, 1
      %s123 = scalar_select %p120, %s121, %s122
      %p126 = pneg %p120
      %p127 = scmp.eq.s32.totalorder %s22, 1
      %p128 = por %p126, %p127
      %p129 = scmp.ne.s32.totalorder %s121, %s124
      %p130 = scmp.eq.s32.totalorder %s22, 0
      %p131 = por %p129, %p130
      %p132 = scmp.ne.s32.totalorder %s121, %s124
      %p133 = scmp.eq.s32.totalorder %s27, 1
      %p134 = por %p132, %p133
      %p135 = scmp.ne.s32.totalorder %s124, %s125
      %p136 = scmp.eq.s32.totalorder %s27, 0
      %p137 = por %p135, %p136
      %p138 = scmp.ne.s32.totalorder %s124, %s125
      %p139 = scmp.eq.s32.totalorder %s28, 1
      %p140 = por %p138, %p139
      %p142 = scmp.ne.s32.totalorder %s125, %s141
      %p143 = scmp.eq.s32.totalorder %s28, 0
      %p144 = por %p142, %p143
      %s146 = sadd.s32 %s145, 1
      %p149 = scmp.eq.s32.totalorder %s22, 1
      %p150 = scmp.ne.s32.totalorder %s145, %s147
      %p151 = scmp.eq.s32.totalorder %s22, 0
      %p152 = por %p150, %p151
      %p153 = scmp.ne.s32.totalorder %s145, %s147
      %p154 = scmp.eq.s32.totalorder %s27, 1
      %p155 = por %p153, %p154
      %p156 = scmp.ne.s32.totalorder %s147, %s148
      %p157 = scmp.eq.s32.totalorder %s27, 0
      %p158 = por %p156, %p157
      %p159 = scmp.ne.s32.totalorder %s147, %s148
      %p160 = scmp.eq.s32.totalorder %s28, 1
      %p161 = por %p159, %p160
      %p163 = scmp.ne.s32.totalorder %s148, %s162
      %p164 = scmp.eq.s32.totalorder %s28, 0
      %p165 = por %p163, %p164
      %s167 = sadd.s32 %s166, 1
      %p170 = scmp.eq.s32.totalorder %s22, 1
      %p171 = scmp.ne.s32.totalorder %s166, %s168
      %p172 = scmp.eq.s32.totalorder %s22, 0
      %p173 = por %p171, %p172
      %p174 = scmp.ne.s32.totalorder %s166, %s168
      %p175 = scmp.eq.s32.totalorder %s27, 1
      %p176 = por %p174, %p175
      %p177 = scmp.ne.s32.totalorder %s168, %s169
      %p178 = scmp.eq.s32.totalorder %s27, 0
      %p179 = por %p177, %p178
      %p180 = scmp.ne.s32.totalorder %s168, %s169
      %p181 = scmp.eq.s32.totalorder %s28, 1
      %p182 = por %p180, %p181
      %p184 = scmp.ne.s32.totalorder %s169, %s183
      %p185 = scmp.eq.s32.totalorder %s28, 0
      %p186 = por %p184, %p185
      %s188 = sadd.s32 %s187, 1
      %p191 = scmp.eq.s32.totalorder %s22, 1
      %p192 = scmp.ne.s32.totalorder %s187, %s189
      %p193 = scmp.eq.s32.totalorder %s22, 0
      %p194 = por %p192, %p193
      %p195 = scmp.ne.s32.totalorder %s187, %s189
      %p196 = scmp.eq.s32.totalorder %s27, 1
      %p197 = por %p195, %p196
      %p198 = scmp.ne.s32.totalorder %s189, %s190
      %p199 = scmp.eq.s32.totalorder %s27, 0
      %p200 = por %p198, %p199
      %p201 = scmp.ne.s32.totalorder %s189, %s190
      %p202 = scmp.eq.s32.totalorder %s28, 1
      %p203 = por %p201, %p202
      %p205 = scmp.ne.s32.totalorder %s190, %s204
      %p206 = scmp.eq.s32.totalorder %s28, 0
      %p207 = por %p205, %p206
      %s208 = ssub.s32 %s22, %s29
      %p209 = scmp.eq.s32.totalorder %s208, 0
      %s211 = sadd.s32 %s210, 1
      %s212 = scalar_select %p209, %s210, %s211
      %p215 = pneg %p209
      %p216 = scmp.eq.s32.totalorder %s22, 1
      %p217 = por %p215, %p216
      %p218 = scmp.ne.s32.totalorder %s210, %s213
      %p219 = scmp.eq.s32.totalorder %s22, 0
      %p220 = por %p218, %p219
      %p221 = scmp.ne.s32.totalorder %s210, %s213
      %p222 = scmp.eq.s32.totalorder %s27, 1
      %p223 = por %p221, %p222
      %p224 = scmp.ne.s32.totalorder %s213, %s214
      %p225 = scmp.eq.s32.totalorder %s27, 0
      %p226 = por %p224, %p225
      %p227 = scmp.ne.s32.totalorder %s213, %s214
      %p228 = scmp.eq.s32.totalorder %s28, 1
      %p229 = por %p227, %p228
      %p231 = scmp.ne.s32.totalorder %s214, %s230
      %p232 = scmp.eq.s32.totalorder %s28, 0
      %p233 = por %p231, %p232
      %p234 = scmp.le.s32.totalorder 1, %s22
      %p235 = scmp.lt.s32.totalorder %s22, 3
      %p236 = pnand %p234, %p235
      %p237 = pneg %p236
      // Predicated region
      $region9: #{tpu_custom_call.1} parent=5 // pred_check
        _
      $region10: #{tpu_custom_call.1} parent=5 // pred_check_branch
        %239 = sbr.rel (%p236) target = $region12
      $region11: #{tpu_custom_call.1} parent=5 // pred_region
        %s240 = ssub.s32 %s22, 1
        // Predicated region
        $region13: #{tpu_custom_call.1} parent=11 // pred_check
          %p241 = pneg %p69
        $region14: #{tpu_custom_call.1} parent=11 // pred_check_branch
          %243 = sbr.rel (%p241) target = $region16
        $region15: #{tpu_custom_call.1} parent=11 // pred_region
          %245 = vsyncadd [#allocation6], 0
          %s246 = sshll.u32 %s1, 4
          %s247 = int_to_ptr.hbm [resolvable:$true] %s246
          %s248 = sshll.u32 [#allocation5], 4
          %s249 = int_to_ptr.vmem [resolvable:$true] %s248
          %254 = dma.hbm_to_vmem [thread:$0]  %s247, 4608, %s249, [#allocation6], 64, 64, 4
        $region16: #{tpu_custom_call.1} parent=11 // pred_fallthru
          _
        // Predicated region
        $region17: #{tpu_custom_call.1} parent=11 // pred_check
          %p255 = pneg %p90
        $region18: #{tpu_custom_call.1} parent=11 // pred_check_branch
          %257 = sbr.rel (%p255) target = $region20
        $region19: #{tpu_custom_call.1} parent=11 // pred_region
          _
        $region20: #{tpu_custom_call.1} parent=11 // pred_fallthru
          _
        // Predicated region
        $region21: #{tpu_custom_call.1} parent=11 // pred_check
          %p258 = pneg %p111
        $region22: #{tpu_custom_call.1} parent=11 // pred_check_branch
          %260 = sbr.rel (%p258) target = $region24
        $region23: #{tpu_custom_call.1} parent=11 // pred_region
          _
        $region24: #{tpu_custom_call.1} parent=11 // pred_fallthru
          _
        // Predicated region
        $region25: #{tpu_custom_call.1} parent=11 // pred_check
          %p261 = pneg %p158
        $region26: #{tpu_custom_call.1} parent=11 // pred_check_branch
          %263 = sbr.rel (%p261) target = $region28
        $region27: #{tpu_custom_call.1} parent=11 // pred_region
          _
        $region28: #{tpu_custom_call.1} parent=11 // pred_fallthru
          _
        // Predicated region
        $region29: #{tpu_custom_call.1} parent=11 // pred_check
          %p264 = pneg %p179
        $region30: #{tpu_custom_call.1} parent=11 // pred_check_branch
          %266 = sbr.rel (%p264) target = $region32
        $region31: #{tpu_custom_call.1} parent=11 // pred_region
          %268 = vsyncadd [#allocation6], 0
          %s269 = sshll.u32 %s6, 4
          %s270 = int_to_ptr.hbm [resolvable:$true] %s269
          %s271 = sshll.u32 [#allocation8], 4
          %s272 = int_to_ptr.vmem [resolvable:$true] %s271
          %277 = dma.hbm_to_vmem [thread:$0]  %s270, 2048, %s272, [#allocation6], 128, 128, 8
        $region32: #{tpu_custom_call.1} parent=11 // pred_fallthru
          _
        // Predicated region
        $region33: #{tpu_custom_call.1} parent=11 // pred_check
          %p278 = pneg %p200
        $region34: #{tpu_custom_call.1} parent=11 // pred_check_branch
          %280 = sbr.rel (%p278) target = $region36
        $region35: #{tpu_custom_call.1} parent=11 // pred_region
          %282 = vsyncadd [#allocation10], 0
          %s283 = sshll.u32 %s7, 4
          %s284 = int_to_ptr.hbm [resolvable:$true] %s283
          %s285 = sshll.u32 [#allocation9], 4
          %s286 = int_to_ptr.vmem [resolvable:$true] %s285
          %291 = dma.hbm_to_vmem [thread:$0]  %s284, 256, %s286, [#allocation10], 128, 128, 8
        $region36: #{tpu_custom_call.1} parent=11 // pred_fallthru
          _
      $region12: #{tpu_custom_call.1} parent=5 // pred_fallthru
        _
      %p292 = scmp.lt.s32.totalorder %s22, 2
      // Predicated region
      $region37: #{tpu_custom_call.1} parent=5 // pred_check
        %p293 = pneg %p292
      $region38: #{tpu_custom_call.1} parent=5 // pred_check_branch
        %295 = sbr.rel (%p293) target = $region40
      $region39: #{tpu_custom_call.1} parent=5 // pred_region
        // Predicated region
        $region41: #{tpu_custom_call.1} parent=39 // pred_check
          %p296 = pneg %p42
        $region42: #{tpu_custom_call.1} parent=39 // pred_check_branch
          %298 = sbr.rel (%p296) target = $region44
        $region43: #{tpu_custom_call.1} parent=39 // pred_region
          %s299 = sand.u32 %s22, 1
          %s300 = scalar_lea.sflag [#allocation3], %s299
          %s301 = sand.u32 %s32, 1
          %s302 = smul.addr %s301, 20
          %s303 = scalar_lea.vmem [#allocation2], %s302
          %305 = vsyncadd %s300, 0
          %s306 = smul.addr %s22, 5
          %s307 = smul.addr %s306, 4
          %s308 = scalar_lea.hbm %s0, %s307
          %s310 = sshll.u32 %s308, 4
          %s311 = int_to_ptr.hbm [resolvable:$true] %s310
          %s312 = sshll.u32 %s303, 4
          %s313 = int_to_ptr.vmem [resolvable:$true] %s312
          %315 = dma.hbm_to_vmem [thread:$0]  %s311, 320, %s313, %s300
        $region44: #{tpu_custom_call.1} parent=39 // pred_fallthru
          _
        // Predicated region
        $region45: #{tpu_custom_call.1} parent=39 // pred_check
          %p316 = pneg %p131
        $region46: #{tpu_custom_call.1} parent=39 // pred_check_branch
          %318 = sbr.rel (%p316) target = $region48
        $region47: #{tpu_custom_call.1} parent=39 // pred_region
          %s319 = sand.u32 %s22, 1
          %s320 = scalar_lea.sflag [#allocation3], %s319
          %s321 = sand.u32 %s121, 1
          %s322 = smul.addr %s321, 16
          %s323 = scalar_lea.vmem [#allocation7], %s322
          %325 = vsyncadd %s320, 0
          %s326 = smul.addr %s22, 2
          %s327 = smul.addr %s326, 8
          %s328 = scalar_lea.hbm %s4, %s327
          %s329 = sshll.u32 %s328, 4
          %s330 = int_to_ptr.hbm [resolvable:$true] %s329
          %s331 = sshll.u32 %s323, 4
          %s332 = int_to_ptr.vmem [resolvable:$true] %s331
          %337 = dma.hbm_to_vmem [thread:$0]  %s330, 256, %s332, %s320, 128, 128, 8
        $region48: #{tpu_custom_call.1} parent=39 // pred_fallthru
          _
      $region40: #{tpu_custom_call.1} parent=5 // pred_fallthru
        _
      %p338 = scmp.le.s32.totalorder 1, %s22
      %p339 = scmp.lt.s32.totalorder %s22, 3
      %p340 = pnand %p338, %p339
      %p341 = pneg %p340
      // Predicated region
      $region49: #{tpu_custom_call.1} parent=5 // pred_check
        _
      $region50: #{tpu_custom_call.1} parent=5 // pred_check_branch
        %343 = sbr.rel (%p340) target = $region52
      $region51: #{tpu_custom_call.1} parent=5 // pred_region
        %s344 = ssub.s32 %s22, 1
        %s345 = sand.u32 %s27, 1
        %s346 = scalar_lea.sflag [#allocation3], %s345
        %s347 = sand.u32 %s35, 1
        %s348 = smul.addr %s347, 20
        %s349 = scalar_lea.vmem [#allocation2], %s348
        // Predicated region
        $region53: #{tpu_custom_call.1} parent=51 // pred_check
          %p350 = pneg %p48
        $region54: #{tpu_custom_call.1} parent=51 // pred_check_branch
          %352 = sbr.rel (%p350) target = $region56
        $region55: #{tpu_custom_call.1} parent=51 // pred_region
          %354 = dma.done %s346, 320
        $region56: #{tpu_custom_call.1} parent=51 // pred_fallthru
          _
        // Predicated region
        $region57: #{tpu_custom_call.1} parent=51 // pred_check
          %p355 = pneg %p69
        $region58: #{tpu_custom_call.1} parent=51 // pred_check_branch
          %357 = sbr.rel (%p355) target = $region60
        $region59: #{tpu_custom_call.1} parent=51 // pred_region
          %359 = dma.done [#allocation6], 4608
        $region60: #{tpu_custom_call.1} parent=51 // pred_fallthru
          _
        %s360 = sand.u32 %s27, 1
        %s361 = scalar_lea.sflag [#allocation3], %s360
        %s362 = sand.u32 %s124, 1
        %s363 = smul.addr %s362, 16
        %s364 = scalar_lea.vmem [#allocation7], %s363
        // Predicated region
        $region61: #{tpu_custom_call.1} parent=51 // pred_check
          %p365 = pneg %p137
        $region62: #{tpu_custom_call.1} parent=51 // pred_check_branch
          %367 = sbr.rel (%p365) target = $region64
        $region63: #{tpu_custom_call.1} parent=51 // pred_region
          %369 = dma.done %s361, 256
        $region64: #{tpu_custom_call.1} parent=51 // pred_fallthru
          _
        // Predicated region
        $region65: #{tpu_custom_call.1} parent=51 // pred_check
          %p370 = pneg %p179
        $region66: #{tpu_custom_call.1} parent=51 // pred_check_branch
          %372 = sbr.rel (%p370) target = $region68
        $region67: #{tpu_custom_call.1} parent=51 // pred_region
          %374 = dma.done [#allocation6], 2048
        $region68: #{tpu_custom_call.1} parent=51 // pred_fallthru
          _
        // Predicated region
        $region69: #{tpu_custom_call.1} parent=51 // pred_check
          %p375 = pneg %p200
        $region70: #{tpu_custom_call.1} parent=51 // pred_check_branch
          %377 = sbr.rel (%p375) target = $region72
        $region71: #{tpu_custom_call.1} parent=51 // pred_region
          %379 = dma.done [#allocation10], 256
        $region72: #{tpu_custom_call.1} parent=51 // pred_fallthru
          _
        %s380 = sand.u32 %s27, 1
        %s381 = scalar_lea.sflag [#allocation3], %s380
        %s382 = sand.u32 %s35, 1
        %s383 = smul.addr %s382, 20
        %s384 = scalar_lea.vmem [#allocation2], %s383
        %p385 = pneg %p48
        %p386 = pneg %p45
        %p387 = pneg %p69
        %p388 = pneg %p66
        %p389 = pneg %p90
        %p390 = pneg %p87
        %p391 = pneg %p111
        %p392 = pneg %p108
        %s393 = sand.u32 %s27, 1
        %s394 = scalar_lea.sflag [#allocation3], %s393
        %s395 = sand.u32 %s124, 1
        %s396 = smul.addr %s395, 16
        %s397 = scalar_lea.vmem [#allocation7], %s396
        %p398 = pneg %p137
        %p399 = pneg %p134
        %p400 = pneg %p158
        %p401 = pneg %p155
        %p402 = pneg %p179
        %p403 = pneg %p176
        %p404 = pneg %p200
        %p405 = pneg %p197
        %p406 = pneg %p226
        %p407 = pneg %p223
        %s408 = sand.u32 %s213, 1
        %s409 = scalar_lea.sflag [#allocation4], %s408
        %s410 = sand.u32 %s213, 1
        %s411 = smul.addr %s410, 16
        %s412 = scalar_lea.vmem [#allocation11], %s411
        %v414 = vld [vmem:[%s349] sm:$0xff]
        %v415 = vld [vmem:[%s349 + $0x8] sm:$0xff]
        %v416 = vld [vmem:[%s349 + $0x10] sm:$0xf]
        %v417 = vunpack.c.l.bf16 %v414
        %v418 = vunpack.c.h.bf16 %v414
        %v419 = vunpack.c.l.bf16 %v415
        %v420 = vunpack.c.h.bf16 %v415
        %v421 = vunpack.c.l.bf16 %v416
        %v422 = vmax.f32 %v417, 0.0
        %v423 = vmax.f32 %v418, 0.0
        %v424 = vmax.f32 %v419, 0.0
        %v425 = vmax.f32 %v420, 0.0
        %v426 = vmax.f32 %v421, 0.0
        %v427 = vpack.c.bf16 %v422, %v422
        %v428 = vpack.c.bf16 %v423, %v423
        %v429 = vpack.c.bf16 %v424, %v424
        %v430 = vpack.c.bf16 %v425, %v425
        %v431 = vpack.c.bf16 %v426, %v426
        %v432 = vld [vmem:[#allocation5] sm:$0xf]
        %v433 = vld [vmem:[#allocation5 + $0x4] sm:$0xf]
        %v434 = vld [vmem:[#allocation5 + $0x8] sm:$0xf]
        %v435 = vld [vmem:[#allocation5 + $0xc] sm:$0xf]
        %v436 = vld [vmem:[#allocation5 + $0x10] sm:$0xf]
        %v437 = vld [vmem:[#allocation5 + $0x14] sm:$0xf]
        %v438 = vld [vmem:[#allocation5 + $0x18] sm:$0xf]
        %v439 = vld [vmem:[#allocation5 + $0x1c] sm:$0xf]
        %v440 = vld [vmem:[#allocation5 + $0x20] sm:$0xf]
        %v441 = vld [vmem:[#allocation5 + $0x24] sm:$0xf]
        %v442 = vld [vmem:[#allocation5 + $0x28] sm:$0xf]
        %v443 = vld [vmem:[#allocation5 + $0x2c] sm:$0xf]
        %v444 = vld [vmem:[#allocation5 + $0x30] sm:$0xf]
        %v445 = vld [vmem:[#allocation5 + $0x34] sm:$0xf]
        %v446 = vld [vmem:[#allocation5 + $0x38] sm:$0xf]
        %v447 = vld [vmem:[#allocation5 + $0x3c] sm:$0xf]
        %v448 = vld [vmem:[#allocation5 + $0x40] sm:$0xf]
        %v449 = vld [vmem:[#allocation5 + $0x44] sm:$0xf]
        %v450 = vld [vmem:[#allocation5 + $0x48] sm:$0xf]
        %v451 = vld [vmem:[#allocation5 + $0x4c] sm:$0xf]
        %v452 = vld [vmem:[#allocation5 + $0x50] sm:$0xf]
        %v453 = vld [vmem:[#allocation5 + $0x54] sm:$0xf]
        %v454 = vld [vmem:[#allocation5 + $0x58] sm:$0xf]
        %v455 = vld [vmem:[#allocation5 + $0x5c] sm:$0xf]
        %v456 = vld [vmem:[#allocation5 + $0x60] sm:$0xf]
        %v457 = vld [vmem:[#allocation5 + $0x64] sm:$0xf]
        %v458 = vld [vmem:[#allocation5 + $0x68] sm:$0xf]
        %v459 = vld [vmem:[#allocation5 + $0x6c] sm:$0xf]
        %v460 = vld [vmem:[#allocation5 + $0x70] sm:$0xf]
        %v461 = vld [vmem:[#allocation5 + $0x74] sm:$0xf]
        %v462 = vld [vmem:[#allocation5 + $0x78] sm:$0xf]
        %v463 = vld [vmem:[#allocation5 + $0x7c] sm:$0xf]
        %v464 = vld [vmem:[#allocation5 + $0x80] sm:$0xf]
        %v465 = vld [vmem:[#allocation5 + $0x84] sm:$0xf]
        %v466 = vld [vmem:[#allocation5 + $0x88] sm:$0xf]
        %v467 = vld [vmem:[#allocation5 + $0x8c] sm:$0xf]
        %v468 = vld [vmem:[#allocation5 + $0x90] sm:$0xf]
        %v469 = vld [vmem:[#allocation5 + $0x94] sm:$0xf]
        %v470 = vld [vmem:[#allocation5 + $0x98] sm:$0xf]
        %v471 = vld [vmem:[#allocation5 + $0x9c] sm:$0xf]
        %v472 = vld [vmem:[#allocation5 + $0xa0] sm:$0xf]
        %v473 = vld [vmem:[#allocation5 + $0xa4] sm:$0xf]
        %v474 = vld [vmem:[#allocation5 + $0xa8] sm:$0xf]
        %v475 = vld [vmem:[#allocation5 + $0xac] sm:$0xf]
        %v476 = vld [vmem:[#allocation5 + $0xb0] sm:$0xf]
        %v477 = vld [vmem:[#allocation5 + $0xb4] sm:$0xf]
        %v478 = vld [vmem:[#allocation5 + $0xb8] sm:$0xf]
        %v479 = vld [vmem:[#allocation5 + $0xbc] sm:$0xf]
        %v480 = vld [vmem:[#allocation5 + $0xc0] sm:$0xf]
        %v481 = vld [vmem:[#allocation5 + $0xc4] sm:$0xf]
        %v482 = vld [vmem:[#allocation5 + $0xc8] sm:$0xf]
        %v483 = vld [vmem:[#allocation5 + $0xcc] sm:$0xf]
        %v484 = vld [vmem:[#allocation5 + $0xd0] sm:$0xf]
        %v485 = vld [vmem:[#allocation5 + $0xd4] sm:$0xf]
        %v486 = vld [vmem:[#allocation5 + $0xd8] sm:$0xf]
        %v487 = vld [vmem:[#allocation5 + $0xdc] sm:$0xf]
        %v488 = vld [vmem:[#allocation5 + $0xe0] sm:$0xf]
        %v489 = vld [vmem:[#allocation5 + $0xe4] sm:$0xf]
        %v490 = vld [vmem:[#allocation5 + $0xe8] sm:$0xf]
        %v491 = vld [vmem:[#allocation5 + $0xec] sm:$0xf]
        %v492 = vld [vmem:[#allocation5 + $0xf0] sm:$0xf]
        %v493 = vld [vmem:[#allocation5 + $0xf4] sm:$0xf]
        %v494 = vld [vmem:[#allocation5 + $0xf8] sm:$0xf]
        %v495 = vld [vmem:[#allocation5 + $0xfc] sm:$0xf]
        %v496 = vld [vmem:[#allocation5 + $0x100] sm:$0xf]
        %v497 = vld [vmem:[#allocation5 + $0x104] sm:$0xf]
        %v498 = vld [vmem:[#allocation5 + $0x108] sm:$0xf]
        %v499 = vld [vmem:[#allocation5 + $0x10c] sm:$0xf]
        %v500 = vld [vmem:[#allocation5 + $0x110] sm:$0xf]
        %v501 = vld [vmem:[#allocation5 + $0x114] sm:$0xf]
        %v502 = vld [vmem:[#allocation5 + $0x118] sm:$0xf]
        %v503 = vld [vmem:[#allocation5 + $0x11c] sm:$0xf]
        %v576 = vunpack.c.l.b16 %v432
        %v577 = vunpack.c.l.b16 %v433
        %v578 = vunpack.c.l.b16 %v434
        %v579 = vunpack.c.l.b16 %v435
        %v580 = vunpack.c.l.b16 %v436
        %v581 = vunpack.c.l.b16 %v437
        %v582 = vunpack.c.l.b16 %v438
        %v583 = vunpack.c.l.b16 %v439
        %v584 = vunpack.c.l.b16 %v440
        %v585 = vunpack.c.l.b16 %v441
        %v586 = vunpack.c.l.b16 %v442
        %v587 = vunpack.c.l.b16 %v443
        %v588 = vunpack.c.l.b16 %v444
        %v589 = vunpack.c.l.b16 %v445
        %v590 = vunpack.c.l.b16 %v446
        %v591 = vunpack.c.l.b16 %v447
        %v592 = vunpack.c.l.b16 %v448
        %v593 = vunpack.c.l.b16 %v449
        %v594 = vunpack.c.l.b16 %v450
        %v595 = vunpack.c.l.b16 %v451
        %v596 = vunpack.c.l.b16 %v452
        %v597 = vunpack.c.l.b16 %v453
        %v598 = vunpack.c.l.b16 %v454
        %v599 = vunpack.c.l.b16 %v455
        %v600 = vunpack.c.l.b16 %v456
        %v601 = vunpack.c.l.b16 %v457
        %v602 = vunpack.c.l.b16 %v458
        %v603 = vunpack.c.l.b16 %v459
        %v604 = vunpack.c.l.b16 %v460
        %v605 = vunpack.c.l.b16 %v461
        %v606 = vunpack.c.l.b16 %v462
        %v607 = vunpack.c.l.b16 %v463
        %v608 = vunpack.c.l.b16 %v464
        %v609 = vunpack.c.l.b16 %v465
        %v610 = vunpack.c.l.b16 %v466
        %v611 = vunpack.c.l.b16 %v467
        %v612 = vunpack.c.l.b16 %v468
        %v613 = vunpack.c.l.b16 %v469
        %v614 = vunpack.c.l.b16 %v470
        %v615 = vunpack.c.l.b16 %v471
        %v616 = vunpack.c.l.b16 %v472
        %v617 = vunpack.c.l.b16 %v473
        %v618 = vunpack.c.l.b16 %v474
        %v619 = vunpack.c.l.b16 %v475
        %v620 = vunpack.c.l.b16 %v476
        %v621 = vunpack.c.l.b16 %v477
        %v622 = vunpack.c.l.b16 %v478
        %v623 = vunpack.c.l.b16 %v479
        %v624 = vunpack.c.l.b16 %v480
        %v625 = vunpack.c.l.b16 %v481
        %v626 = vunpack.c.l.b16 %v482
        %v627 = vunpack.c.l.b16 %v483
        %v628 = vunpack.c.l.b16 %v484
        %v629 = vunpack.c.l.b16 %v485
        %v630 = vunpack.c.l.b16 %v486
        %v631 = vunpack.c.l.b16 %v487
        %v632 = vunpack.c.l.b16 %v488
        %v633 = vunpack.c.l.b16 %v489
        %v634 = vunpack.c.l.b16 %v490
        %v635 = vunpack.c.l.b16 %v491
        %v636 = vunpack.c.l.b16 %v492
        %v637 = vunpack.c.l.b16 %v493
        %v638 = vunpack.c.l.b16 %v494
        %v639 = vunpack.c.l.b16 %v495
        %v640 = vunpack.c.l.b16 %v496
        %v641 = vunpack.c.l.b16 %v497
        %v642 = vunpack.c.l.b16 %v498
        %v643 = vunpack.c.l.b16 %v499
        %v644 = vunpack.c.l.b16 %v500
        %v645 = vunpack.c.l.b16 %v501
        %v646 = vunpack.c.l.b16 %v502
        %v647 = vunpack.c.l.b16 %v503
        %v648 = vpack.c.b16 %v577, %v576
        %v649 = vpack.c.b16 %v579, %v578
        %v650 = vpack.c.b16 %v581, %v580
        %v651 = vpack.c.b16 %v583, %v582
        %v652 = vpack.c.b16 %v585, %v584
        %v653 = vpack.c.b16 %v587, %v586
        %v654 = vpack.c.b16 %v589, %v588
        %v655 = vpack.c.b16 %v591, %v590
        %v656 = vpack.c.b16 %v593, %v592
        %v657 = vpack.c.b16 %v595, %v594
        %v658 = vpack.c.b16 %v597, %v596
        %v659 = vpack.c.b16 %v599, %v598
        %v660 = vpack.c.b16 %v601, %v600
        %v661 = vpack.c.b16 %v603, %v602
        %v662 = vpack.c.b16 %v605, %v604
        %v663 = vpack.c.b16 %v607, %v606
        %v664 = vpack.c.b16 %v609, %v608
        %v665 = vpack.c.b16 %v611, %v610
        %v666 = vpack.c.b16 %v613, %v612
        %v667 = vpack.c.b16 %v615, %v614
        %v668 = vpack.c.b16 %v617, %v616
        %v669 = vpack.c.b16 %v619, %v618
        %v670 = vpack.c.b16 %v621, %v620
        %v671 = vpack.c.b16 %v623, %v622
        %v672 = vpack.c.b16 %v625, %v624
        %v673 = vpack.c.b16 %v627, %v626
        %v674 = vpack.c.b16 %v629, %v628
        %v675 = vpack.c.b16 %v631, %v630
        %v676 = vpack.c.b16 %v633, %v632
        %v677 = vpack.c.b16 %v635, %v634
        %v678 = vpack.c.b16 %v637, %v636
        %v679 = vpack.c.b16 %v639, %v638
        %v680 = vpack.c.b16 %v641, %v640
        %v681 = vpack.c.b16 %v643, %v642
        %v682 = vpack.c.b16 %v645, %v644
        %v683 = vpack.c.b16 %v647, %v646
        %vm720 = vcmask 523264
        %v722 = vsel %vm720, %v431, 0
        %724 = vmatpush.bf16.msra.mxu0 %v655
        %725 = vmatpush.bf16.msra.mxu0 %v654
        %726 = vmatpush.bf16.msra.mxu0 %v653
        %727 = vmatpush.bf16.msra.mxu0 %v652
        %728 = vmatpush.bf16.msra.mxu0 %v651
        %729 = vmatpush.bf16.msra.mxu0 %v650
        %730 = vmatpush.bf16.msra.mxu0 %v649
        %731 = vmatpush.bf16.msra.mxu0 %v648
        %732 = vmatmul.bf16.gmra.mxu0 %v427
        %v733 = vpop.f32.mrf.mxu0
        %v734 = vadd.f32 0.0, %v733
        %v735 = vpop.f32.mrf.mxu0
        %736 = vdwg.mxu0
        %737 = vmatpush.bf16.msra.mxu0 %v663
        %738 = vmatpush.bf16.msra.mxu0 %v662
        %739 = vmatpush.bf16.msra.mxu0 %v661
        %740 = vmatpush.bf16.msra.mxu0 %v660
        %741 = vmatpush.bf16.msra.mxu0 %v659
        %742 = vmatpush.bf16.msra.mxu0 %v658
        %743 = vmatpush.bf16.msra.mxu0 %v657
        %744 = vmatpush.bf16.msra.mxu0 %v656
        %745 = vmatmul.bf16.gmra.mxu0 %v428
        %v746 = vpop.f32.mrf.mxu0
        %v747 = vadd.f32 %v734, %v746
        %v748 = vpop.f32.mrf.mxu0
        %749 = vdwg.mxu0
        %750 = vmatpush.bf16.msra.mxu0 %v671
        %751 = vmatpush.bf16.msra.mxu0 %v670
        %752 = vmatpush.bf16.msra.mxu0 %v669
        %753 = vmatpush.bf16.msra.mxu0 %v668
        %754 = vmatpush.bf16.msra.mxu0 %v667
        %755 = vmatpush.bf16.msra.mxu0 %v666
        %756 = vmatpush.bf16.msra.mxu0 %v665
        %757 = vmatpush.bf16.msra.mxu0 %v664
        %758 = vmatmul.bf16.gmra.mxu0 %v429
        %v759 = vpop.f32.mrf.mxu0
        %v760 = vadd.f32 %v747, %v759
        %v761 = vpop.f32.mrf.mxu0
        %762 = vdwg.mxu0
        %763 = vmatpush.bf16.msra.mxu0 %v679
        %764 = vmatpush.bf16.msra.mxu0 %v678
        %765 = vmatpush.bf16.msra.mxu0 %v677
        %766 = vmatpush.bf16.msra.mxu0 %v676
        %767 = vmatpush.bf16.msra.mxu0 %v675
        %768 = vmatpush.bf16.msra.mxu0 %v674
        %769 = vmatpush.bf16.msra.mxu0 %v673
        %770 = vmatpush.bf16.msra.mxu0 %v672
        %771 = vmatmul.bf16.gmra.mxu0 %v430
        %v772 = vpop.f32.mrf.mxu0
        %v773 = vadd.f32 %v760, %v772
        %v774 = vpop.f32.mrf.mxu0
        %775 = vdwg.mxu0
        %776 = vmatpush.bf16.msra.mxu0 0
        %777 = vmatpush.bf16.msra.mxu0 0
        %778 = vmatpush.bf16.msra.mxu0 0
        %779 = vmatpush.bf16.msra.mxu0 0
        %780 = vmatpush.bf16.msra.mxu0 %v683
        %781 = vmatpush.bf16.msra.mxu0 %v682
        %782 = vmatpush.bf16.msra.mxu0 %v681
        %783 = vmatpush.bf16.msra.mxu0 %v680
        %784 = vmatmul.bf16.gmra.mxu0 %v722
        %v785 = vpop.f32.mrf.mxu0
        %v786 = vadd.f32 %v773, %v785
        %v787 = vpop.f32.mrf.mxu0
        %788 = vdwg.mxu0
        %v789 = vld [vmem:[%s2] sm:$0xff]
        %v790 = vld [vmem:[%s2 + $0x8] sm:$0xff]
        %v791 = vld [vmem:[%s364] sm:$0xff]
        %v792 = vld [vmem:[%s364 + $0x8] sm:$0xff]
        %v793 = vld [vmem:[%s5] sm:$0xff]
        %v794 = vld [vmem:[%s5 + $0x8] sm:$0xff]
        %vm795 = vcmask 130048
        %v797 = vsel %vm795, %v793, 0
        %v800 = vsel %vm795, %v794, 0
        %802 = vmatpush.msra.mxu0 0.0
        %803 = vmatpush.msra.mxu0 0.0
        %804 = vmatpush.msra.mxu0 0.0
        %805 = vmatpush.msra.mxu0 0.0
        %806 = vmatpush.msra.mxu0 0.0
        %807 = vmatpush.msra.mxu0 0.0
        %808 = vmatpush.msra.mxu0 0.0
        %809 = vmatpush.msra.mxu0 0.0
        %810 = vmatpush.msra.mxu0 0.0
        %811 = vmatpush.msra.mxu0 0.0
        %812 = vmatpush.msra.mxu0 0.0
        %813 = vmatpush.msra.mxu0 0.0
        %814 = vmatpush.msra.mxu0 0.0
        %815 = vmatpush.msra.mxu0 0.0
        %816 = vmatpush.msra.mxu0 %v792
        %817 = vmatpush.msra.mxu0 %v791
        %818 = vmatmul.f32.gmra.mxu0 %v797
        %v819 = vpop.f32.mrf.mxu0
        %v820 = vadd.f32 0.0, %v819
        %821 = vmatmul.f32.gmra.mxu0 %v800
        %v822 = vpop.f32.mrf.mxu0
        %v823 = vadd.f32 0.0, %v822
        %824 = vdwg.mxu0
        %v825 = vld [vmem:[#allocation8] sm:$0xff]
        %v826 = vld [vmem:[#allocation8 + $0x8] sm:$0xff]
        %v827 = vld [vmem:[#allocation8 + $0x10] sm:$0xff]
        %v828 = vld [vmem:[#allocation8 + $0x18] sm:$0xff]
        %v829 = vld [vmem:[#allocation8 + $0x20] sm:$0xff]
        %v830 = vld [vmem:[#allocation8 + $0x28] sm:$0xff]
        %v831 = vld [vmem:[#allocation8 + $0x30] sm:$0xff]
        %v832 = vld [vmem:[#allocation8 + $0x38] sm:$0xff]
        %v833 = vld [vmem:[#allocation8 + $0x40] sm:$0xff]
        %v834 = vld [vmem:[#allocation8 + $0x48] sm:$0xff]
        %v835 = vld [vmem:[#allocation8 + $0x50] sm:$0xff]
        %v836 = vld [vmem:[#allocation8 + $0x58] sm:$0xff]
        %v837 = vld [vmem:[#allocation8 + $0x60] sm:$0xff]
        %v838 = vld [vmem:[#allocation8 + $0x68] sm:$0xff]
        %v839 = vld [vmem:[#allocation8 + $0x70] sm:$0xff]
        %v840 = vld [vmem:[#allocation8 + $0x78] sm:$0xff]
        %841 = vmatpush.msra.mxu0 %v840
        %842 = vmatpush.msra.mxu0 %v839
        %843 = vmatpush.msra.mxu0 %v838
        %844 = vmatpush.msra.mxu0 %v837
        %845 = vmatpush.msra.mxu0 %v836
        %846 = vmatpush.msra.mxu0 %v835
        %847 = vmatpush.msra.mxu0 %v834
        %848 = vmatpush.msra.mxu0 %v833
        %849 = vmatpush.msra.mxu0 %v832
        %850 = vmatpush.msra.mxu0 %v831
        %851 = vmatpush.msra.mxu0 %v830
        %852 = vmatpush.msra.mxu0 %v829
        %853 = vmatpush.msra.mxu0 %v828
        %854 = vmatpush.msra.mxu0 %v827
        %855 = vmatpush.msra.mxu0 %v826
        %856 = vmatpush.msra.mxu0 %v825
        %857 = vmatmul.f32.gmra.mxu0 %v820
        %v858 = vpop.f32.mrf.mxu0
        %v859 = vadd.f32 0.0, %v858
        %860 = vmatmul.f32.gmra.mxu0 %v823
        %v861 = vpop.f32.mrf.mxu0
        %v862 = vadd.f32 0.0, %v861
        %863 = vdwg.mxu0
        %v864 = vld [vmem:[#allocation9] sm:$0xff]
        %v865 = vld [vmem:[#allocation9 + $0x8] sm:$0xff]
        %v866 = vmul.f32 %v859, %v864
        %v867 = vmul.f32 %v862, %v865
        %v868 = vld [vmem:[%s3] sm:$0x1]
        %v870 = vperm.slane %v868, 0
        %vm872 = vcmask 64512
        %v874 = vsel %vm872, %v789, 0
        %v877 = vsel %vm872, %v790, 0
        %879 = vmatpush.msra.mxu0 0.0
        %880 = vmatpush.msra.mxu0 0.0
        %881 = vmatpush.msra.mxu0 0.0
        %882 = vmatpush.msra.mxu0 0.0
        %883 = vmatpush.msra.mxu0 0.0
        %884 = vmatpush.msra.mxu0 0.0
        %885 = vmatpush.msra.mxu0 0.0
        %886 = vmatpush.msra.mxu0 0.0
        %887 = vmatpush.msra.mxu0 0.0
        %888 = vmatpush.msra.mxu0 0.0
        %889 = vmatpush.msra.mxu0 0.0
        %890 = vmatpush.msra.mxu0 0.0
        %891 = vmatpush.msra.mxu0 0.0
        %892 = vmatpush.msra.mxu0 0.0
        %893 = vmatpush.msra.mxu0 0.0
        %894 = vmatpush.msra.mxu0 %v786
        %895 = vmatmul.f32.gmra.mxu0 %v874
        %v896 = vpop.f32.mrf.mxu0
        %v897 = vadd.f32 %v870, %v896
        %898 = vmatmul.f32.gmra.mxu0 %v877
        %v899 = vpop.f32.mrf.mxu0
        %v900 = vadd.f32 %v870, %v899
        %901 = vdwg.mxu0
        %v902 = vadd.f32 %v897, %v866
        %v903 = vadd.f32 %v900, %v867
        %904 = vst [vmem:[%s412] sm:$0xff] %v902
        %905 = vst [vmem:[%s412 + $0x8] sm:$0xff] %v903
        %s906 = sand.u32 %s213, 1
        %s907 = scalar_lea.sflag [#allocation4], %s906
        %s908 = sand.u32 %s213, 1
        %s909 = smul.addr %s908, 16
        %s910 = scalar_lea.vmem [#allocation11], %s909
        // Predicated region
        $region73: #{tpu_custom_call.1} parent=51 // pred_check
          %p911 = pneg %p223
        $region74: #{tpu_custom_call.1} parent=51 // pred_check_branch
          %913 = sbr.rel (%p911) target = $region76
        $region75: #{tpu_custom_call.1} parent=51 // pred_region
          %915 = vsyncadd %s907, 0
          %s916 = smul.addr %s27, 2
          %s917 = smul.addr %s916, 8
          %s918 = scalar_lea.hbm %s8, %s917
          %s919 = sshll.u32 %s910, 4
          %s920 = int_to_ptr.vmem [resolvable:$true] %s919
          %s921 = sshll.u32 %s918, 4
          %s922 = int_to_ptr.hbm [resolvable:$true] %s921
          %927 = dma.vmem_to_hbm [thread:$0]  %s920, 256, %s922, %s907, 128, 128, 8
        $region76: #{tpu_custom_call.1} parent=51 // pred_fallthru
          _
      $region52: #{tpu_custom_call.1} parent=5 // pred_fallthru
        _
      %p928 = scmp.le.s32.totalorder 2, %s22
      // Predicated region
      $region77: #{tpu_custom_call.1} parent=5 // pred_check
        %p929 = pneg %p928
      $region78: #{tpu_custom_call.1} parent=5 // pred_check_branch
        %931 = sbr.rel (%p929) target = $region80
      $region79: #{tpu_custom_call.1} parent=5 // pred_region
        %s932 = ssub.s32 %s22, 2
        // Predicated region
        $region81: #{tpu_custom_call.1} parent=79 // pred_check
          %p933 = pneg %p229
        $region82: #{tpu_custom_call.1} parent=79 // pred_check_branch
          %935 = sbr.rel (%p933) target = $region84
        $region83: #{tpu_custom_call.1} parent=79 // pred_region
          %s936 = sand.u32 %s214, 1
          %s937 = scalar_lea.sflag [#allocation4], %s936
          %s938 = sand.u32 %s214, 1
          %s939 = smul.addr %s938, 16
          %s940 = scalar_lea.vmem [#allocation11], %s939
          %942 = dma.done %s937, 256
        $region84: #{tpu_custom_call.1} parent=79 // pred_fallthru
          _
      $region80: #{tpu_custom_call.1} parent=5 // pred_fallthru
        _
    $region6: #{tpu_custom_call.1} parent=1 // loop_footer
      %s26 = sadd.s32 1, %s22
    $region7: #{tpu_custom_call.1} parent=1 // loop_footer_branch
      %21 = sbr.rel target = $region3
    $region8: #{tpu_custom_call.1} parent=1 // loop_exit
      _
    %943 = vsyncpa [#allocation3], 1
    %s944 = scalar_lea.sflag [#allocation3], 1
    %945 = vsyncpa %s944, 1
    %946 = vsyncpa [#allocation6], 1
    %947 = vsyncpa [#allocation10], 1
    %948 = vsyncpa [#allocation4], 1
    %s949 = scalar_lea.sflag [#allocation4], 1
    %950 = vsyncpa %s949, 1

</llo_original>
